<compile_context>
chip_gen: v7x
topology: tpu7x:2x2x1
jax: 0.10.0
libtpu: 0.0.40
codegen_flags: <defaults>
</compile_context>

<pallas_src>
import jax
import jax.numpy as jnp
from jax.experimental import pallas as pl
from jax.experimental.pallas import tpu as pltpu


def _ucgm_forward_kernel(x_ref,        # (R, HWT)  VMEM,  R = N*C, lanes = HW tile
                         wbig_ref,     # (R, R)    VMEM,  kron(I_N, w^T)
                         scale_ref,    # (R, 1)    VMEM,  1 + 0.1*t  per row
                         bias_ref,     # (R, 1)    VMEM,  b[c] + class_emb[y][c]
                         t_ref,        # (R, 1)    VMEM,  t per row
                         omt_ref,      # (R, 1)    VMEM,  1 - t per row
                         xhat_ref, zhat_ref, ft_ref):   # (R, HWT) each
    x = x_ref[...]                                       # fully packed vregs

    # ---- synthetic inner model: F_t = model(x_t, _t, y=c) ----
    # One block-diagonal matmul for the whole batch:
    #   f[n*C+d, hw] = sum_c w[c, d] * x[n*C+c, hw]
    f = jnp.dot(wbig_ref[...], x, preferred_element_type=jnp.float32)
    # FiLM-like time scale + (bias + class embedding), lane-broadcast columns.
    f = f * scale_ref[...] + bias_ref[...]

    # ---- UCGMTS.forward transport algebra (Linear transport) ----
    # dent = alpha_in*gamma_to - gamma_in*alpha_to = -t - (1-t) = -1,
    # so 1/dent is a sign flip folded into the affine combinations.
    ft_ref[...] = f
    zhat_ref[...] = x + f * omt_ref[...]   # (x*g_to - F*g_in) / dent
    xhat_ref[...] = x - f * t_ref[...]     # (F*a_in - x*a_to) / dent


def _pick_hw_tile(hw, rows):
    """Lane-dense cdiv tile: fits a conservative VMEM budget, >= 2 steps."""
    if hw <= 128:
        return hw                                   # full-extent block
    # Per-step footprint ~ 2(double-buffer) * (1 in + 3 out) * rows * tile * 4B.
    budget_bytes = 24 * 1024 * 1024                 # fits v7x 32 MiB scoped default
    per_lane_bytes = 2 * 4 * rows * 4
    cap = max(128, (budget_bytes // per_lane_bytes) // 128 * 128)
    target = min(cap, 8192)
    n_tiles = max(2, pl.cdiv(hw, target))           # >=2 steps for v7x megacore
    tile = min(cap, max(128, ((pl.cdiv(hw, n_tiles) + 127) // 128) * 128))
    return tile


def ucgm_forward(x_nchw, t, w, b, class_emb, y):
    """Pallas implementation of UCGMTS.forward(model, x_t, t, y=c).

    Returns (x_hat, z_hat, F_t, dent) in NCHW / (N,1,1,1), like the PyTorch
    module.
    """
    N, C, H, W = x_nchw.shape
    HW = H * W
    R = N * C

    # Free layout change: NCHW -> (N*C, HW) is a pure reshape, no transpose.
    x_rows = x_nchw.reshape(R, HW)
    t_flat = t.reshape(N).astype(jnp.float32)

    # Block-diagonal weight so one matmul covers the whole batch:
    #   f = kron(I_N, w^T) @ x_rows.
    wbig = jnp.kron(jnp.eye(N, dtype=jnp.float32), jnp.transpose(w))   # (R, R)

    # Per-row (per-sample, per-channel) lane-broadcast columns.
    t_col = jnp.repeat(t_flat, C).reshape(R, 1)                        # t
    omt_col = 1.0 - t_col                                              # 1 - t
    scale_col = 1.0 + 0.1 * t_col                                      # 1 + 0.1*t
    bias_col = (b.reshape(1, C) + class_emb[y]).reshape(R, 1)          # b + emb[y]

    hw_tile = _pick_hw_tile(HW, R)
    num_hw_tiles = pl.cdiv(HW, hw_tile)

    out_shape = tuple(
        jax.ShapeDtypeStruct((R, HW), jnp.float32) for _ in range(3))

    x_hat, z_hat, f_t = pl.pallas_call(
        _ucgm_forward_kernel,
        grid=(num_hw_tiles,),
        in_specs=[
            pl.BlockSpec((R, hw_tile), lambda h: (0, h)),   # x (lane-tiled)
            pl.BlockSpec((R, R),       lambda h: (0, 0)),   # kron(I, w^T)
            pl.BlockSpec((R, 1),       lambda h: (0, 0)),   # scale
            pl.BlockSpec((R, 1),       lambda h: (0, 0)),   # bias + emb
            pl.BlockSpec((R, 1),       lambda h: (0, 0)),   # t
            pl.BlockSpec((R, 1),       lambda h: (0, 0)),   # 1 - t
        ],
        out_specs=[
            pl.BlockSpec((R, hw_tile), lambda h: (0, h)),   # x_hat
            pl.BlockSpec((R, hw_tile), lambda h: (0, h)),   # z_hat
            pl.BlockSpec((R, hw_tile), lambda h: (0, h)),   # F_t
        ],
        out_shape=out_shape,
        compiler_params=pltpu.CompilerParams(
            dimension_semantics=("parallel",),
            vmem_limit_bytes=48 * 1024 * 1024,
        ),
    )(x_rows, wbig, scale_col, bias_col, t_col, omt_col)

    # Outputs come back already in NCHW order; reshape is free.
    x_hat = x_hat.reshape(N, C, H, W)
    z_hat = z_hat.reshape(N, C, H, W)
    f_t = f_t.reshape(N, C, H, W)

    # dent is a pure scalar function of t (glue; identically -1 for Linear).
    tb = t.reshape(N, 1, 1, 1)
    dent = tb * (-1.0) - (1.0 - tb) * 1.0
    return x_hat, z_hat, f_t, dent


if __name__ == "__main__":
    key = jax.random.PRNGKey(0)
    N, C, H, W = 2, 4, 16, 16
    num_classes = 10

    k1, k2, k3, k4, k5, k6 = jax.random.split(key, 6)
    x_t = jax.random.normal(k1, (N, C, H, W), dtype=jnp.float32)
    t = jax.random.uniform(k2, (N, 1, 1, 1), dtype=jnp.float32,
                           minval=0.05, maxval=0.95)
    w = 0.1 * jax.random.normal(k3, (C, C), dtype=jnp.float32)
    b = 0.1 * jax.random.normal(k4, (1, C), dtype=jnp.float32)
    class_emb = 0.1 * jax.random.normal(k5, (num_classes + 1, C),
                                        dtype=jnp.float32)
    y = jax.random.randint(k6, (N,), 0, num_classes)

    x_hat, z_hat, f_t, dent = jax.block_until_ready(
        ucgm_forward(x_t, t, w, b, class_emb, y))

    # pure-JAX reference of the same forward pass (NCHW)
    tb = t
    f_ref = (jnp.einsum("nchw,cd->ndhw", x_t, w) * (1.0 + 0.1 * tb)
             + b.reshape(1, C, 1, 1) + class_emb[y].reshape(N, C, 1, 1))
    a_in, g_in, a_to, g_to = tb, 1.0 - tb, 1.0, -1.0
    d_ref = a_in * g_to - g_in * a_to
    z_ref = (x_t * g_to - f_ref * g_in) / d_ref
    x_ref = (f_ref * a_in - x_t * a_to) / d_ref

    assert jnp.allclose(f_t, f_ref, atol=1e-4, rtol=1e-4)
    assert jnp.allclose(z_hat, z_ref, atol=1e-4, rtol=1e-4)
    assert jnp.allclose(x_hat, x_ref, atol=1e-4, rtol=1e-4)
    assert jnp.allclose(dent, d_ref, atol=1e-6)

    print("KERNEL_OK")
</pallas_src>

<mosaic_0001>
module attributes {stable_mosaic.version = 11 : i64} {
  func.func @_ucgm_forward_kernel(%arg0: i32, %arg1: memref<8x128xf32, #tpu.memory_space<vmem>>, %arg2: memref<8x8xf32, #tpu.memory_space<vmem>>, %arg3: memref<8x1xf32, #tpu.memory_space<vmem>>, %arg4: memref<8x1xf32, #tpu.memory_space<vmem>>, %arg5: memref<8x1xf32, #tpu.memory_space<vmem>>, %arg6: memref<8x1xf32, #tpu.memory_space<vmem>>, %arg7: memref<8x128xf32, #tpu.memory_space<vmem>>, %arg8: memref<8x128xf32, #tpu.memory_space<vmem>>, %arg9: memref<8x128xf32, #tpu.memory_space<vmem>>) attributes {dimension_semantics = [#tpu.dimension_semantics<parallel>], iteration_bounds = array<i64: 2>, scalar_prefetch = 0 : i64, scratch_operands = 0 : i64, tpu.core_type = #tpu.core_type<tc>, window_params = [{transform_indices = @transform_0, window_bounds = array<i64: 8, 128>}, {pipeline_mode = #tpu.pipeline_mode<synchronous>, transform_indices = @transform_1, window_bounds = array<i64: 8, 8>}, {pipeline_mode = #tpu.pipeline_mode<synchronous>, transform_indices = @transform_2, window_bounds = array<i64: 8, 1>}, {pipeline_mode = #tpu.pipeline_mode<synchronous>, transform_indices = @transform_3, window_bounds = array<i64: 8, 1>}, {pipeline_mode = #tpu.pipeline_mode<synchronous>, transform_indices = @transform_4, window_bounds = array<i64: 8, 1>}, {pipeline_mode = #tpu.pipeline_mode<synchronous>, transform_indices = @transform_5, window_bounds = array<i64: 8, 1>}, {transform_indices = @transform_6, window_bounds = array<i64: 8, 128>}, {transform_indices = @transform_7, window_bounds = array<i64: 8, 128>}, {transform_indices = @transform_8, window_bounds = array<i64: 8, 128>}]} {
    %c0 = arith.constant 0 : index
    %c0_0 = arith.constant 0 : index
    %0 = vector.load %arg1[%c0, %c0_0] : memref<8x128xf32, #tpu.memory_space<vmem>>, vector<8x128xf32>
    %c0_1 = arith.constant 0 : index
    %c0_2 = arith.constant 0 : index
    %1 = vector.load %arg2[%c0_1, %c0_2] : memref<8x8xf32, #tpu.memory_space<vmem>>, vector<8x8xf32>
    %cst = arith.constant dense<0.000000e+00> : vector<8x128xf32>
    %2 = tpu.matmul %1, %0, %cst {dimension_numbers = #tpu.dot_dimension_numbers<[1], [0], [0], [1], [0, 0, 1, 1], [], []>} : vector<8x8xf32>, vector<8x128xf32>, vector<8x128xf32> -> vector<8x128xf32>
    %c0_3 = arith.constant 0 : index
    %c0_4 = arith.constant 0 : index
    %3 = vector.load %arg3[%c0_3, %c0_4] : memref<8x1xf32, #tpu.memory_space<vmem>>, vector<8x1xf32>
    %4 = vector.broadcast %3 : vector<8x1xf32> to vector<8x128xf32>
    %5 = arith.mulf %2, %4 : vector<8x128xf32>
    %c0_5 = arith.constant 0 : index
    %c0_6 = arith.constant 0 : index
    %6 = vector.load %arg4[%c0_5, %c0_6] : memref<8x1xf32, #tpu.memory_space<vmem>>, vector<8x1xf32>
    %7 = vector.broadcast %6 : vector<8x1xf32> to vector<8x128xf32>
    %8 = arith.addf %5, %7 : vector<8x128xf32>
    %c0_7 = arith.constant 0 : index
    %c0_8 = arith.constant 0 : index
    %9 = vector.load %arg9[%c0_7, %c0_8] : memref<8x128xf32, #tpu.memory_space<vmem>>, vector<8x128xf32>
    tpu.vector_store %arg9[%c0_7, %c0_8], %8 {strides = array<i32>} : memref<8x128xf32, #tpu.memory_space<vmem>>, vector<8x128xf32>,
    %c0_9 = arith.constant 0 : index
    %c0_10 = arith.constant 0 : index
    %10 = vector.load %arg6[%c0_9, %c0_10] : memref<8x1xf32, #tpu.memory_space<vmem>>, vector<8x1xf32>
    %11 = vector.broadcast %10 : vector<8x1xf32> to vector<8x128xf32>
    %12 = arith.mulf %8, %11 : vector<8x128xf32>
    %13 = arith.addf %0, %12 : vector<8x128xf32>
    %c0_11 = arith.constant 0 : index
    %c0_12 = arith.constant 0 : index
    %14 = vector.load %arg8[%c0_11, %c0_12] : memref<8x128xf32, #tpu.memory_space<vmem>>, vector<8x128xf32>
    tpu.vector_store %arg8[%c0_11, %c0_12], %13 {strides = array<i32>} : memref<8x128xf32, #tpu.memory_space<vmem>>, vector<8x128xf32>,
    %c0_13 = arith.constant 0 : index
    %c0_14 = arith.constant 0 : index
    %15 = vector.load %arg5[%c0_13, %c0_14] : memref<8x1xf32, #tpu.memory_space<vmem>>, vector<8x1xf32>
    %16 = vector.broadcast %15 : vector<8x1xf32> to vector<8x128xf32>
    %17 = arith.mulf %8, %16 : vector<8x128xf32>
    %18 = arith.subf %0, %17 : vector<8x128xf32>
    %c0_15 = arith.constant 0 : index
    %c0_16 = arith.constant 0 : index
    %19 = vector.load %arg7[%c0_15, %c0_16] : memref<8x128xf32, #tpu.memory_space<vmem>>, vector<8x128xf32>
    tpu.vector_store %arg7[%c0_15, %c0_16], %18 {strides = array<i32>} : memref<8x128xf32, #tpu.memory_space<vmem>>, vector<8x128xf32>,
    return
  }
  func.func @transform_0(%arg0: i32) -> (i32, i32) {
    %c0_i32 = arith.constant 0 : i32
    %c0_i32_0 = arith.constant 0 : i32
    return %c0_i32, %arg0 : i32, i32
  }
  func.func @transform_1(%arg0: i32) -> (i32, i32) {
    %c0_i32 = arith.constant 0 : i32
    %c0_i32_0 = arith.constant 0 : i32
    %c0_i32_1 = arith.constant 0 : i32
    return %c0_i32, %c0_i32_0 : i32, i32
  }
  func.func @transform_2(%arg0: i32) -> (i32, i32) {
    %c0_i32 = arith.constant 0 : i32
    %c0_i32_0 = arith.constant 0 : i32
    %c0_i32_1 = arith.constant 0 : i32
    return %c0_i32, %c0_i32_0 : i32, i32
  }
  func.func @transform_3(%arg0: i32) -> (i32, i32) {
    %c0_i32 = arith.constant 0 : i32
    %c0_i32_0 = arith.constant 0 : i32
    %c0_i32_1 = arith.constant 0 : i32
    return %c0_i32, %c0_i32_0 : i32, i32
  }
  func.func @transform_4(%arg0: i32) -> (i32, i32) {
    %c0_i32 = arith.constant 0 : i32
    %c0_i32_0 = arith.constant 0 : i32
    %c0_i32_1 = arith.constant 0 : i32
    return %c0_i32, %c0_i32_0 : i32, i32
  }
  func.func @transform_5(%arg0: i32) -> (i32, i32) {
    %c0_i32 = arith.constant 0 : i32
    %c0_i32_0 = arith.constant 0 : i32
    %c0_i32_1 = arith.constant 0 : i32
    return %c0_i32, %c0_i32_0 : i32, i32
  }
  func.func @transform_6(%arg0: i32) -> (i32, i32) {
    %c0_i32 = arith.constant 0 : i32
    %c0_i32_0 = arith.constant 0 : i32
    return %c0_i32, %arg0 : i32, i32
  }
  func.func @transform_7(%arg0: i32) -> (i32, i32) {
    %c0_i32 = arith.constant 0 : i32
    %c0_i32_0 = arith.constant 0 : i32
    return %c0_i32, %arg0 : i32, i32
  }
  func.func @transform_8(%arg0: i32) -> (i32, i32) {
    %c0_i32 = arith.constant 0 : i32
    %c0_i32_0 = arith.constant 0 : i32
    return %c0_i32, %arg0 : i32, i32
  }
}

</mosaic_0001>

<llo_original>
// kernel: tpu_custom_call.1
$region0: #{tpu_custom_call.1}
  #allocation0 [shape = 'u32[]', space=smem, size = 0x4, offset = 0x4, fixed_abs, tag = 'smem constant byte address 0x4 - core index']
  #allocation1 [shape = 'u32[144,128]{1,0:T(1,128)}', space=vmem, size = 0x12000, scoped, tag = 'internal scratch']
  %s0 = inlined_call_operand.vmem [shape: f32[8,256], index: 0, kind: input, shape index: {}]
  %s1 = inlined_call_operand.vmem [shape: f32[8,8], index: 1, kind: input, shape index: {}]
  %s2 = inlined_call_operand.vmem [shape: f32[8,1], index: 2, kind: input, shape index: {}]
  %s3 = inlined_call_operand.vmem [shape: f32[8,1], index: 3, kind: input, shape index: {}]
  %s4 = inlined_call_operand.vmem [shape: f32[8,1], index: 4, kind: input, shape index: {}]
  %s5 = inlined_call_operand.vmem [shape: f32[8,1], index: 5, kind: input, shape index: {}]
  %s6 = inlined_call_operand.hbm [shape: f32[8,256], index: 6, kind: output, shape index: {0}]
  %s7 = inlined_call_operand.hbm [shape: f32[8,256], index: 7, kind: output, shape index: {1}]
  %s8 = inlined_call_operand.hbm [shape: f32[8,256], index: 8, kind: output, shape index: {2}]
  %9 = xla_tuple %s6, %s7, %s8
  %s10 = sld [smem:[#allocation0]]
  $region73: #{tpu_custom_call.1} parent=0
    _
  %s12 = ssub.s32 1, %s10
  %s13 = scalar_select 0, %s12, %s10
  $region1: #{tpu_custom_call.1} parent=0
    #allocation2 [shape = 'u8[8192]{0}', space=vmem, size = 0x2000, scoped, tag = 'output window, operand 0']
    #allocation3 [shape = 's32[2]{0}', space=sflag, size = 0x8, scoped, tag = 'scoped memory for tpu_custom_call.1']
    #allocation4 [shape = 'u8[8192]{0}', space=vmem, size = 0x2000, scoped, tag = 'output window, operand 1']
    #allocation5 [shape = 's32[2]{0}', space=sflag, size = 0x8, scoped, tag = 'scoped memory for tpu_custom_call.1']
    #allocation6 [shape = 'u8[8192]{0}', space=vmem, size = 0x2000, scoped, tag = 'output window, operand 2']
    %14 = vsyncpa [#allocation3], 0
    %s15 = scalar_lea.sflag [#allocation3], 1
    %16 = vsyncpa %s15, 0
    %17 = vsyncpa [#allocation5], 0
    %s18 = scalar_lea.sflag [#allocation5], 1
    %19 = vsyncpa %s18, 0
    loop: start=0, step=1, limit=4
    $region2: #{tpu_custom_call.1} parent=1 // loop_pre_header
      _
    $region3: #{tpu_custom_call.1} parent=1 // loop_header
      %s21 = sphi 0, %s25
      %p22 = scmp.ge.s32.totalorder %s21, 4
      %s31 = sphi 0, %s33
      %s34 = sphi 0, %s31
      %s35 = sphi 0, %s34
      %s51 = sphi 0, %s35
      %s55 = sphi 0, %s55
      %s57 = sphi 0, %s55
      %s58 = sphi 0, %s57
      %s72 = sphi 0, %s58
      %s76 = sphi 0, %s76
      %s78 = sphi 0, %s76
      %s79 = sphi 0, %s78
      %s93 = sphi 0, %s79
      %s97 = sphi 0, %s97
      %s99 = sphi 0, %s97
      %s100 = sphi 0, %s99
      %s114 = sphi 0, %s100
      %s118 = sphi 0, %s118
      %s120 = sphi 0, %s118
      %s121 = sphi 0, %s120
      %s135 = sphi 0, %s121
      %s139 = sphi 0, %s139
      %s141 = sphi 0, %s139
      %s142 = sphi 0, %s141
      %s156 = sphi 0, %s142
      %s162 = sphi 0, %s164
      %s165 = sphi 0, %s162
      %s166 = sphi 0, %s165
      %s182 = sphi 0, %s166
      %s188 = sphi 0, %s190
      %s191 = sphi 0, %s188
      %s192 = sphi 0, %s191
      %s208 = sphi 0, %s192
      %s214 = sphi 0, %s216
      %s217 = sphi 0, %s214
      %s218 = sphi 0, %s217
      %s234 = sphi 0, %s218
    $region4: #{tpu_custom_call.1} parent=1 // loop_header_branch
      %24 = sbr.rel (%p22) target = $region8
    $region5: #{tpu_custom_call.1} parent=1 // loop_body
      %s26 = ssub.s32 %s21, 1
      %s27 = ssub.s32 %s21, 2
      %s28 = sadd.s32 %s21, 1
      %s29 = ssub.s32 %s21, %s28
      %p30 = scmp.eq.s32.totalorder %s29, 0
      %s32 = sadd.s32 %s31, 1
      %s33 = scalar_select %p30, %s31, %s32
      %p36 = pneg %p30
      %p37 = scmp.eq.s32.totalorder %s21, 1
      %p38 = por %p36, %p37
      %p39 = scmp.ne.s32.totalorder %s31, %s34
      %p40 = scmp.eq.s32.totalorder %s21, 0
      %p41 = por %p39, %p40
      %p42 = scmp.ne.s32.totalorder %s31, %s34
      %p43 = scmp.eq.s32.totalorder %s26, 1
      %p44 = por %p42, %p43
      %p45 = scmp.ne.s32.totalorder %s34, %s35
      %p46 = scmp.eq.s32.totalorder %s26, 0
      %p47 = por %p45, %p46
      %p48 = scmp.ne.s32.totalorder %s34, %s35
      %p49 = scmp.eq.s32.totalorder %s27, 1
      %p50 = por %p48, %p49
      %p52 = scmp.ne.s32.totalorder %s35, %s51
      %p53 = scmp.eq.s32.totalorder %s27, 0
      %p54 = por %p52, %p53
      %s56 = sadd.s32 %s55, 1
      %p59 = scmp.eq.s32.totalorder %s21, 1
      %p60 = scmp.ne.s32.totalorder %s55, %s57
      %p61 = scmp.eq.s32.totalorder %s21, 0
      %p62 = por %p60, %p61
      %p63 = scmp.ne.s32.totalorder %s55, %s57
      %p64 = scmp.eq.s32.totalorder %s26, 1
      %p65 = por %p63, %p64
      %p66 = scmp.ne.s32.totalorder %s57, %s58
      %p67 = scmp.eq.s32.totalorder %s26, 0
      %p68 = por %p66, %p67
      %p69 = scmp.ne.s32.totalorder %s57, %s58
      %p70 = scmp.eq.s32.totalorder %s27, 1
      %p71 = por %p69, %p70
      %p73 = scmp.ne.s32.totalorder %s58, %s72
      %p74 = scmp.eq.s32.totalorder %s27, 0
      %p75 = por %p73, %p74
      %s77 = sadd.s32 %s76, 1
      %p80 = scmp.eq.s32.totalorder %s21, 1
      %p81 = scmp.ne.s32.totalorder %s76, %s78
      %p82 = scmp.eq.s32.totalorder %s21, 0
      %p83 = por %p81, %p82
      %p84 = scmp.ne.s32.totalorder %s76, %s78
      %p85 = scmp.eq.s32.totalorder %s26, 1
      %p86 = por %p84, %p85
      %p87 = scmp.ne.s32.totalorder %s78, %s79
      %p88 = scmp.eq.s32.totalorder %s26, 0
      %p89 = por %p87, %p88
      %p90 = scmp.ne.s32.totalorder %s78, %s79
      %p91 = scmp.eq.s32.totalorder %s27, 1
      %p92 = por %p90, %p91
      %p94 = scmp.ne.s32.totalorder %s79, %s93
      %p95 = scmp.eq.s32.totalorder %s27, 0
      %p96 = por %p94, %p95
      %s98 = sadd.s32 %s97, 1
      %p101 = scmp.eq.s32.totalorder %s21, 1
      %p102 = scmp.ne.s32.totalorder %s97, %s99
      %p103 = scmp.eq.s32.totalorder %s21, 0
      %p104 = por %p102, %p103
      %p105 = scmp.ne.s32.totalorder %s97, %s99
      %p106 = scmp.eq.s32.totalorder %s26, 1
      %p107 = por %p105, %p106
      %p108 = scmp.ne.s32.totalorder %s99, %s100
      %p109 = scmp.eq.s32.totalorder %s26, 0
      %p110 = por %p108, %p109
      %p111 = scmp.ne.s32.totalorder %s99, %s100
      %p112 = scmp.eq.s32.totalorder %s27, 1
      %p113 = por %p111, %p112
      %p115 = scmp.ne.s32.totalorder %s100, %s114
      %p116 = scmp.eq.s32.totalorder %s27, 0
      %p117 = por %p115, %p116
      %s119 = sadd.s32 %s118, 1
      %p122 = scmp.eq.s32.totalorder %s21, 1
      %p123 = scmp.ne.s32.totalorder %s118, %s120
      %p124 = scmp.eq.s32.totalorder %s21, 0
      %p125 = por %p123, %p124
      %p126 = scmp.ne.s32.totalorder %s118, %s120
      %p127 = scmp.eq.s32.totalorder %s26, 1
      %p128 = por %p126, %p127
      %p129 = scmp.ne.s32.totalorder %s120, %s121
      %p130 = scmp.eq.s32.totalorder %s26, 0
      %p131 = por %p129, %p130
      %p132 = scmp.ne.s32.totalorder %s120, %s121
      %p133 = scmp.eq.s32.totalorder %s27, 1
      %p134 = por %p132, %p133
      %p136 = scmp.ne.s32.totalorder %s121, %s135
      %p137 = scmp.eq.s32.totalorder %s27, 0
      %p138 = por %p136, %p137
      %s140 = sadd.s32 %s139, 1
      %p143 = scmp.eq.s32.totalorder %s21, 1
      %p144 = scmp.ne.s32.totalorder %s139, %s141
      %p145 = scmp.eq.s32.totalorder %s21, 0
      %p146 = por %p144, %p145
      %p147 = scmp.ne.s32.totalorder %s139, %s141
      %p148 = scmp.eq.s32.totalorder %s26, 1
      %p149 = por %p147, %p148
      %p150 = scmp.ne.s32.totalorder %s141, %s142
      %p151 = scmp.eq.s32.totalorder %s26, 0
      %p152 = por %p150, %p151
      %p153 = scmp.ne.s32.totalorder %s141, %s142
      %p154 = scmp.eq.s32.totalorder %s27, 1
      %p155 = por %p153, %p154
      %p157 = scmp.ne.s32.totalorder %s142, %s156
      %p158 = scmp.eq.s32.totalorder %s27, 0
      %p159 = por %p157, %p158
      %s160 = ssub.s32 %s21, %s28
      %p161 = scmp.eq.s32.totalorder %s160, 0
      %s163 = sadd.s32 %s162, 1
      %s164 = scalar_select %p161, %s162, %s163
      %p167 = pneg %p161
      %p168 = scmp.eq.s32.totalorder %s21, 1
      %p169 = por %p167, %p168
      %p170 = scmp.ne.s32.totalorder %s162, %s165
      %p171 = scmp.eq.s32.totalorder %s21, 0
      %p172 = por %p170, %p171
      %p173 = scmp.ne.s32.totalorder %s162, %s165
      %p174 = scmp.eq.s32.totalorder %s26, 1
      %p175 = por %p173, %p174
      %p176 = scmp.ne.s32.totalorder %s165, %s166
      %p177 = scmp.eq.s32.totalorder %s26, 0
      %p178 = por %p176, %p177
      %p179 = scmp.ne.s32.totalorder %s165, %s166
      %p180 = scmp.eq.s32.totalorder %s27, 1
      %p181 = por %p179, %p180
      %p183 = scmp.ne.s32.totalorder %s166, %s182
      %p184 = scmp.eq.s32.totalorder %s27, 0
      %p185 = por %p183, %p184
      %s186 = ssub.s32 %s21, %s28
      %p187 = scmp.eq.s32.totalorder %s186, 0
      %s189 = sadd.s32 %s188, 1
      %s190 = scalar_select %p187, %s188, %s189
      %p193 = pneg %p187
      %p194 = scmp.eq.s32.totalorder %s21, 1
      %p195 = por %p193, %p194
      %p196 = scmp.ne.s32.totalorder %s188, %s191
      %p197 = scmp.eq.s32.totalorder %s21, 0
      %p198 = por %p196, %p197
      %p199 = scmp.ne.s32.totalorder %s188, %s191
      %p200 = scmp.eq.s32.totalorder %s26, 1
      %p201 = por %p199, %p200
      %p202 = scmp.ne.s32.totalorder %s191, %s192
      %p203 = scmp.eq.s32.totalorder %s26, 0
      %p204 = por %p202, %p203
      %p205 = scmp.ne.s32.totalorder %s191, %s192
      %p206 = scmp.eq.s32.totalorder %s27, 1
      %p207 = por %p205, %p206
      %p209 = scmp.ne.s32.totalorder %s192, %s208
      %p210 = scmp.eq.s32.totalorder %s27, 0
      %p211 = por %p209, %p210
      %s212 = ssub.s32 %s21, %s28
      %p213 = scmp.eq.s32.totalorder %s212, 0
      %s215 = sadd.s32 %s214, 1
      %s216 = scalar_select %p213, %s214, %s215
      %p219 = pneg %p213
      %p220 = scmp.eq.s32.totalorder %s21, 1
      %p221 = por %p219, %p220
      %p222 = scmp.ne.s32.totalorder %s214, %s217
      %p223 = scmp.eq.s32.totalorder %s21, 0
      %p224 = por %p222, %p223
      %p225 = scmp.ne.s32.totalorder %s214, %s217
      %p226 = scmp.eq.s32.totalorder %s26, 1
      %p227 = por %p225, %p226
      %p228 = scmp.ne.s32.totalorder %s217, %s218
      %p229 = scmp.eq.s32.totalorder %s26, 0
      %p230 = por %p228, %p229
      %p231 = scmp.ne.s32.totalorder %s217, %s218
      %p232 = scmp.eq.s32.totalorder %s27, 1
      %p233 = por %p231, %p232
      %p235 = scmp.ne.s32.totalorder %s218, %s234
      %p236 = scmp.eq.s32.totalorder %s27, 0
      %p237 = por %p235, %p236
      %p238 = scmp.le.s32.totalorder 1, %s21
      %p239 = scmp.lt.s32.totalorder %s21, 3
      %p240 = pnand %p238, %p239
      %p241 = pneg %p240
      // Predicated region
      $region9: #{tpu_custom_call.1} parent=5 // pred_check
        _
      $region10: #{tpu_custom_call.1} parent=5 // pred_check_branch
        %243 = sbr.rel (%p240) target = $region12
      $region11: #{tpu_custom_call.1} parent=5 // pred_region
        %s244 = ssub.s32 %s21, 1
        // Predicated region
        $region13: #{tpu_custom_call.1} parent=11 // pred_check
          %p245 = pneg %p68
        $region14: #{tpu_custom_call.1} parent=11 // pred_check_branch
          %247 = sbr.rel (%p245) target = $region16
        $region15: #{tpu_custom_call.1} parent=11 // pred_region
          _
        $region16: #{tpu_custom_call.1} parent=11 // pred_fallthru
          _
        // Predicated region
        $region17: #{tpu_custom_call.1} parent=11 // pred_check
          %p248 = pneg %p89
        $region18: #{tpu_custom_call.1} parent=11 // pred_check_branch
          %250 = sbr.rel (%p248) target = $region20
        $region19: #{tpu_custom_call.1} parent=11 // pred_region
          _
        $region20: #{tpu_custom_call.1} parent=11 // pred_fallthru
          _
        // Predicated region
        $region21: #{tpu_custom_call.1} parent=11 // pred_check
          %p251 = pneg %p110
        $region22: #{tpu_custom_call.1} parent=11 // pred_check_branch
          %253 = sbr.rel (%p251) target = $region24
        $region23: #{tpu_custom_call.1} parent=11 // pred_region
          _
        $region24: #{tpu_custom_call.1} parent=11 // pred_fallthru
          _
        // Predicated region
        $region25: #{tpu_custom_call.1} parent=11 // pred_check
          %p254 = pneg %p131
        $region26: #{tpu_custom_call.1} parent=11 // pred_check_branch
          %256 = sbr.rel (%p254) target = $region28
        $region27: #{tpu_custom_call.1} parent=11 // pred_region
          _
        $region28: #{tpu_custom_call.1} parent=11 // pred_fallthru
          _
        // Predicated region
        $region29: #{tpu_custom_call.1} parent=11 // pred_check
          %p257 = pneg %p152
        $region30: #{tpu_custom_call.1} parent=11 // pred_check_branch
          %259 = sbr.rel (%p257) target = $region32
        $region31: #{tpu_custom_call.1} parent=11 // pred_region
          _
        $region32: #{tpu_custom_call.1} parent=11 // pred_fallthru
          _
      $region12: #{tpu_custom_call.1} parent=5 // pred_fallthru
        _
      %p260 = scmp.lt.s32.totalorder %s21, 2
      // Predicated region
      $region33: #{tpu_custom_call.1} parent=5 // pred_check
        %p261 = pneg %p260
      $region34: #{tpu_custom_call.1} parent=5 // pred_check_branch
        %263 = sbr.rel (%p261) target = $region36
      $region35: #{tpu_custom_call.1} parent=5 // pred_region
        // Predicated region
        $region37: #{tpu_custom_call.1} parent=35 // pred_check
          %p264 = pneg %p41
        $region38: #{tpu_custom_call.1} parent=35 // pred_check_branch
          %266 = sbr.rel (%p264) target = $region40
        $region39: #{tpu_custom_call.1} parent=35 // pred_region
          %p267 = scmp.lt.s32.totalorder %s21, 1
          %s268 = scalar_select %p267, %s21, 1
          %s269 = smul.addr %s268, 8
          %s270 = scalar_lea.vmem %s0, %s269
        $region40: #{tpu_custom_call.1} parent=35 // pred_fallthru
          _
      $region36: #{tpu_custom_call.1} parent=5 // pred_fallthru
        _
      %p271 = scmp.le.s32.totalorder 1, %s21
      %p272 = scmp.lt.s32.totalorder %s21, 3
      %p273 = pnand %p271, %p272
      %p274 = pneg %p273
      // Predicated region
      $region41: #{tpu_custom_call.1} parent=5 // pred_check
        _
      $region42: #{tpu_custom_call.1} parent=5 // pred_check_branch
        %276 = sbr.rel (%p273) target = $region44
      $region43: #{tpu_custom_call.1} parent=5 // pred_region
        %s277 = ssub.s32 %s21, 1
        %p278 = scmp.lt.s32.totalorder %s26, 1
        %s279 = scalar_select %p278, %s26, 1
        %s280 = smul.addr %s279, 8
        %s281 = scalar_lea.vmem %s0, %s280
        %p282 = pneg %p47
        %p283 = pneg %p44
        %p284 = pneg %p68
        %p285 = pneg %p65
        %p286 = pneg %p89
        %p287 = pneg %p86
        %p288 = pneg %p110
        %p289 = pneg %p107
        %p290 = pneg %p131
        %p291 = pneg %p128
        %p292 = pneg %p152
        %p293 = pneg %p149
        %p294 = pneg %p178
        %p295 = pneg %p175
        %s296 = sand.u32 %s165, 1
        %s297 = scalar_lea.sflag [#allocation3], %s296
        %s298 = sand.u32 %s165, 1
        %s299 = smul.addr %s298, 8
        %s300 = scalar_lea.vmem [#allocation2], %s299
        %p301 = pneg %p204
        %p302 = pneg %p201
        %s303 = sand.u32 %s26, 1
        %s304 = scalar_lea.sflag [#allocation5], %s303
        %s305 = sand.u32 %s191, 1
        %s306 = smul.addr %s305, 8
        %s307 = scalar_lea.vmem [#allocation4], %s306
        %p308 = pneg %p230
        %p309 = pneg %p227
        %s310 = sand.u32 %s26, 1
        %s311 = scalar_lea.sflag [#allocation5], %s310
        %s312 = sand.u32 %s217, 1
        %s313 = smul.addr %s312, 8
        %s314 = scalar_lea.vmem [#allocation6], %s313
        %p315 = scmp.lt.s32.totalorder %s26, 1
        %s316 = scalar_select %p315, %s26, 1
        %s317 = smul.addr %s316, 8
        %s318 = scalar_lea.vmem %s0, %s317
        %v319 = vld [vmem:[%s318] sm:$0xff]
        %v320 = vld [vmem:[%s1] sm:$0xff]
        %vm321 = vcmask 64512
        %v323 = vsel %vm321, %v320, 0
        %325 = vmatprep.subr.mxu0 0.0
        %326 = vmatpush1.msra.mxu0 %v319
        %327 = vmatprep.subr.mxu0 0.0
        %328 = vmatpush1.msra.mxu0 0.0
        %329 = vmatprep.subr.mxu0 0.0
        %330 = vmatpush1.msra.mxu0 0.0
        %331 = vmatprep.subr.mxu0 0.0
        %332 = vmatpush1.msra.mxu0 0.0
        %333 = vmatprep.subr.mxu0 0.0
        %334 = vmatpush1.msra.mxu0 0.0
        %335 = vmatprep.subr.mxu0 0.0
        %336 = vmatpush1.msra.mxu0 0.0
        %337 = vmatprep.subr.mxu0 0.0
        %338 = vmatpush1.msra.mxu0 0.0
        %339 = vmatprep.subr.mxu0 0.0
        %340 = vmatpush1.msra.mxu0 0.0
        %341 = vmatprep.subr.mxu0 0.0
        %342 = vmatpush1.msra.mxu0 0.0
        %343 = vmatprep.subr.mxu0 0.0
        %344 = vmatpush1.msra.mxu0 0.0
        %345 = vmatprep.subr.mxu0 0.0
        %346 = vmatpush1.msra.mxu0 0.0
        %347 = vmatprep.subr.mxu0 0.0
        %348 = vmatpush1.msra.mxu0 0.0
        %349 = vmatprep.subr.mxu0 0.0
        %350 = vmatpush1.msra.mxu0 0.0
        %351 = vmatprep.subr.mxu0 0.0
        %352 = vmatpush1.msra.mxu0 0.0
        %353 = vmatprep.subr.mxu0 0.0
        %354 = vmatpush1.msra.mxu0 0.0
        %355 = vmatprep.subr.mxu0 0.0
        %356 = vmatpush1.msra.mxu0 0.0
        %357 = vmatprep.subr.mxu0 0.0
        %358 = vmatpush1.msra.mxu0 0.0
        %359 = vmatprep.subr.mxu0 0.0
        %360 = vmatpush1.msra.mxu0 0.0
        %361 = vmatprep.subr.mxu0 0.0
        %362 = vmatpush1.msra.mxu0 0.0
        %363 = vmatprep.subr.mxu0 0.0
        %364 = vmatpush1.msra.mxu0 0.0
        %365 = vmatprep.subr.mxu0 0.0
        %366 = vmatpush1.msra.mxu0 0.0
        %367 = vmatprep.subr.mxu0 0.0
        %368 = vmatpush1.msra.mxu0 0.0
        %369 = vmatprep.subr.mxu0 0.0
        %370 = vmatpush1.msra.mxu0 0.0
        %371 = vmatprep.subr.mxu0 0.0
        %372 = vmatpush1.msra.mxu0 0.0
        %373 = vmatprep.subr.mxu0 0.0
        %374 = vmatpush1.msra.mxu0 0.0
        %375 = vmatprep.subr.mxu0 0.0
        %376 = vmatpush1.msra.mxu0 0.0
        %377 = vmatprep.subr.mxu0 0.0
        %378 = vmatpush1.msra.mxu0 0.0
        %379 = vmatprep.subr.mxu0 0.0
        %380 = vmatpush1.msra.mxu0 0.0
        %381 = vmatprep.subr.mxu0 0.0
        %382 = vmatpush1.msra.mxu0 0.0
        %383 = vmatprep.subr.mxu0 0.0
        %384 = vmatpush1.msra.mxu0 0.0
        %385 = vmatprep.subr.mxu0 0.0
        %386 = vmatpush1.msra.mxu0 0.0
        %387 = vmatprep.subr.mxu0 0.0
        %388 = vmatpush1.msra.mxu0 0.0
        %389 = vmatprep.mubr.f32.mxu0 0.0
        %390 = vmatmul.mubr.f32.gmra.mrb[0].mxu0 %v323
        %v391 = vpop.f32.mrb[0].mxu0
        %v392 = vadd.f32 0.0, %v391
        %v393 = vpop.f32.mrb[0].mxu0
        %394 = vdwg.mxu0
        %v395 = vld [vmem:[%s2] sm:$0xff]
        %397 = vset.pattern.permute.xlu0 0
        %398 = vperm.xlu0 %397, %v395
        %v399 = vpop.permute.xlu0 %398
        %v401 = vmul.f32 %v392, %v399
        %v402 = vld [vmem:[%s3] sm:$0xff]
        %404 = vset.pattern.permute.xlu0 0
        %405 = vperm.xlu0 %404, %v402
        %v406 = vpop.permute.xlu0 %405
        %v408 = vadd.f32 %v401, %v406
        %409 = vst [vmem:[%s314] sm:$0xff] %v408
        %v410 = vld [vmem:[%s5] sm:$0xff]
        %412 = vset.pattern.permute.xlu0 0
        %413 = vperm.xlu0 %412, %v410
        %v414 = vpop.permute.xlu0 %413
        %v416 = vmul.f32 %v408, %v414
        %v417 = vadd.f32 %v319, %v416
        %418 = vst [vmem:[%s307] sm:$0xff] %v417
        %v419 = vld [vmem:[%s4] sm:$0xff]
        %421 = vset.pattern.permute.xlu0 0
        %422 = vperm.xlu0 %421, %v419
        %v423 = vpop.permute.xlu0 %422
        %v425 = vmul.f32 %v408, %v423
        %v426 = vsub.f32 %v319, %v425
        %427 = vst [vmem:[%s300] sm:$0xff] %v426
        %s428 = sand.u32 %s165, 1
        %s429 = scalar_lea.sflag [#allocation3], %s428
        %s430 = sand.u32 %s165, 1
        %s431 = smul.addr %s430, 8
        %s432 = scalar_lea.vmem [#allocation2], %s431
        %s433 = sand.u32 %s26, 1
        %s434 = scalar_lea.sflag [#allocation5], %s433
        %s435 = sand.u32 %s191, 1
        %s436 = smul.addr %s435, 8
        %s437 = scalar_lea.vmem [#allocation4], %s436
        %s438 = sand.u32 %s26, 1
        %s439 = scalar_lea.sflag [#allocation5], %s438
        %s440 = sand.u32 %s217, 1
        %s441 = smul.addr %s440, 8
        %s442 = scalar_lea.vmem [#allocation6], %s441
        // Predicated region
        $region45: #{tpu_custom_call.1} parent=43 // pred_check
          %p443 = pneg %p175
        $region46: #{tpu_custom_call.1} parent=43 // pred_check_branch
          %445 = sbr.rel (%p443) target = $region48
        $region47: #{tpu_custom_call.1} parent=43 // pred_region
          %s447 = ssub.s32 128, 128
          %448 = vsyncadd %s429, %s447
          %s449 = smul.addr %s26, 128
          %s450 = scalar_lea.hbm %s6, %s449
          %s452 = sshll.u32 %s432, 4
          %s453 = int_to_ptr.vmem [resolvable:$true] %s452
          %455 = dma.vmem_to_hbm [thread:$0]  %s453, 128, %s450, %s429
        $region48: #{tpu_custom_call.1} parent=43 // pred_fallthru
          _
        // Predicated region
        $region49: #{tpu_custom_call.1} parent=43 // pred_check
          %p456 = pneg %p201
        $region50: #{tpu_custom_call.1} parent=43 // pred_check_branch
          %458 = sbr.rel (%p456) target = $region52
        $region51: #{tpu_custom_call.1} parent=43 // pred_region
          %s460 = ssub.s32 128, 128
          %461 = vsyncadd %s434, %s460
          %s462 = smul.addr %s26, 128
          %s463 = scalar_lea.hbm %s7, %s462
          %s465 = sshll.u32 %s437, 4
          %s466 = int_to_ptr.vmem [resolvable:$true] %s465
          %468 = dma.vmem_to_hbm [thread:$0]  %s466, 128, %s463, %s434
        $region52: #{tpu_custom_call.1} parent=43 // pred_fallthru
          _
        // Predicated region
        $region53: #{tpu_custom_call.1} parent=43 // pred_check
          %p469 = pneg %p227
        $region54: #{tpu_custom_call.1} parent=43 // pred_check_branch
          %471 = sbr.rel (%p469) target = $region56
        $region55: #{tpu_custom_call.1} parent=43 // pred_region
          %s473 = ssub.s32 128, 128
          %474 = vsyncadd %s439, %s473
          %s475 = smul.addr %s26, 128
          %s476 = scalar_lea.hbm %s8, %s475
          %s478 = sshll.u32 %s442, 4
          %s479 = int_to_ptr.vmem [resolvable:$true] %s478
          %481 = dma.vmem_to_hbm [thread:$0]  %s479, 128, %s476, %s439
        $region56: #{tpu_custom_call.1} parent=43 // pred_fallthru
          _
      $region44: #{tpu_custom_call.1} parent=5 // pred_fallthru
        _
      %p482 = scmp.le.s32.totalorder 2, %s21
      // Predicated region
      $region57: #{tpu_custom_call.1} parent=5 // pred_check
        %p483 = pneg %p482
      $region58: #{tpu_custom_call.1} parent=5 // pred_check_branch
        %485 = sbr.rel (%p483) target = $region60
      $region59: #{tpu_custom_call.1} parent=5 // pred_region
        %s486 = ssub.s32 %s21, 2
        // Predicated region
        $region61: #{tpu_custom_call.1} parent=59 // pred_check
          %p487 = pneg %p181
        $region62: #{tpu_custom_call.1} parent=59 // pred_check_branch
          %489 = sbr.rel (%p487) target = $region64
        $region63: #{tpu_custom_call.1} parent=59 // pred_region
          %s490 = sand.u32 %s166, 1
          %s491 = scalar_lea.sflag [#allocation3], %s490
          %s492 = sand.u32 %s166, 1
          %s493 = smul.addr %s492, 8
          %s494 = scalar_lea.vmem [#allocation2], %s493
          %495 = dma.done %s491, 128
        $region64: #{tpu_custom_call.1} parent=59 // pred_fallthru
          _
        // Predicated region
        $region65: #{tpu_custom_call.1} parent=59 // pred_check
          %p496 = pneg %p207
        $region66: #{tpu_custom_call.1} parent=59 // pred_check_branch
          %498 = sbr.rel (%p496) target = $region68
        $region67: #{tpu_custom_call.1} parent=59 // pred_region
          %s499 = sand.u32 %s27, 1
          %s500 = scalar_lea.sflag [#allocation5], %s499
          %s501 = sand.u32 %s192, 1
          %s502 = smul.addr %s501, 8
          %s503 = scalar_lea.vmem [#allocation4], %s502
          %504 = dma.done %s500, 128
        $region68: #{tpu_custom_call.1} parent=59 // pred_fallthru
          _
        // Predicated region
        $region69: #{tpu_custom_call.1} parent=59 // pred_check
          %p505 = pneg %p233
        $region70: #{tpu_custom_call.1} parent=59 // pred_check_branch
          %507 = sbr.rel (%p505) target = $region72
        $region71: #{tpu_custom_call.1} parent=59 // pred_region
          %s508 = sand.u32 %s27, 1
          %s509 = scalar_lea.sflag [#allocation5], %s508
          %s510 = sand.u32 %s218, 1
          %s511 = smul.addr %s510, 8
          %s512 = scalar_lea.vmem [#allocation6], %s511
          %513 = dma.done %s509, 128
        $region72: #{tpu_custom_call.1} parent=59 // pred_fallthru
          _
      $region60: #{tpu_custom_call.1} parent=5 // pred_fallthru
        _
    $region6: #{tpu_custom_call.1} parent=1 // loop_footer
      %s25 = sadd.s32 1, %s21
    $region7: #{tpu_custom_call.1} parent=1 // loop_footer_branch
      %20 = sbr.rel target = $region3
    $region8: #{tpu_custom_call.1} parent=1 // loop_exit
      _
    %514 = vsyncpa [#allocation3], 1
    %s515 = scalar_lea.sflag [#allocation3], 1
    %516 = vsyncpa %s515, 1
    %517 = vsyncpa [#allocation5], 1
    %s518 = scalar_lea.sflag [#allocation5], 1
    %519 = vsyncpa %s518, 1

</llo_original>
